<compile_context>
chip_gen: v7x
topology: tpu7x:2x2x1
jax: 0.10.0
libtpu: 0.0.40
codegen_flags: <defaults>
</compile_context>

<pallas_src>
import functools

import jax
import jax.numpy as jnp
from jax.experimental import pallas as pl
from jax.experimental.pallas import tpu as pltpu


# --------------------------------------------------------------------------
# Kernel
# --------------------------------------------------------------------------
def decoder_kernel(x_ref,
                   w1_ref, b1_ref,
                   w2_ref, b2_ref,
                   w3_ref, b3_ref,
                   w4_ref, b4_ref,
                   w5_ref, b5_ref,
                   out_ref):
    # MXU operand dtype is whatever the (pre-cast) weights are stored as.
    mxu_dtype = w1_ref.dtype

    def linear(h, w_ref, b_ref):
        # MXU matmul, f32 accumulation; bias add stays f32 on the VPU.
        return jnp.dot(h.astype(mxu_dtype), w_ref[...],
                       preferred_element_type=jnp.float32) + b_ref[...]

    h = x_ref[...]                                     # (tile, Lp)
    h = jnp.maximum(linear(h, w1_ref, b1_ref), 0.0)    # latent  -> hidden4
    h = jnp.maximum(linear(h, w2_ref, b2_ref), 0.0)    # hidden4 -> hidden3
    h = jnp.maximum(linear(h, w3_ref, b3_ref), 0.0)    # hidden3 -> hidden2
    h = jnp.maximum(linear(h, w4_ref, b4_ref), 0.0)    # hidden2 -> hidden1
    out = linear(h, w5_ref, b5_ref)                    # hidden1 -> output
    out_ref[...] = out.astype(out_ref.dtype)


# --------------------------------------------------------------------------
# Wrapper
# --------------------------------------------------------------------------
def _round_up(x: int, m: int) -> int:
    return ((x + m - 1) // m) * m


def prepare_params(params, mxu_bf16: bool = True):
    """Zero-pad every Linear to 128-lane multiples and (optionally) pre-cast
    the weights to bf16.  Done once, outside jit, so the padded/bf16 weights
    live in HBM persistently.  Padded rows/cols and padded bias lanes are
    zero, so the forward math is unchanged."""
    w_dtype = jnp.bfloat16 if mxu_bf16 else jnp.float32
    prepared = {}
    for idx in range(1, 6):
        w = jnp.asarray(params[f"w{idx}"], jnp.float32)
        b = jnp.asarray(params[f"b{idx}"], jnp.float32).reshape(1, -1)
        din, dout = w.shape
        dinp, doutp = _round_up(din, 128), _round_up(dout, 128)
        prepared[f"w{idx}"] = jnp.pad(
            w, ((0, dinp - din), (0, doutp - dout))).astype(w_dtype)
        prepared[f"b{idx}"] = jnp.pad(b, ((0, 0), (0, doutp - dout)))
    return prepared


def _default_batch_tile(B: int) -> int:
    if B <= 256:
        return B                      # single step; too small to split usefully
    # >=2 grid steps (v7x megacore), tiles of 128-256 rows (amortizes MXU
    # push/drain on v6e), more steps for large B so the pipeline hides the
    # streamed activation DMA.
    return min(256, _round_up((B + 1) // 2, 8))


@functools.partial(jax.jit,
                   static_argnames=("output_size", "batch_tile", "out_bf16"))
def decoder_forward(latent, params, output_size, batch_tile=None,
                    out_bf16=False):
    """latent: (B, latent_length) f32.  params: output of prepare_params.
    output_size: true (unpadded) output width."""
    B, L = latent.shape
    Lp = params["w1"].shape[0]           # padded latent dim
    Op = params["w5"].shape[1]           # padded output dim
    assert L <= Lp and output_size <= Op

    if batch_tile is None:
        batch_tile = _default_batch_tile(B)
    batch_tile = min(batch_tile, _round_up(B, 8))
    Bp = _round_up(B, batch_tile)
    grid = (Bp // batch_tile,)

    # Halve input DMA / skip in-kernel up-cast on the bf16 MXU path.
    if params["w1"].dtype == jnp.bfloat16:
        latent = latent.astype(jnp.bfloat16)
    # Zero-pad batch rows and latent feature lanes.
    latent = jnp.pad(latent, ((0, Bp - B), (0, Lp - L)))

    def resident_spec(arr):
        # Whole weight/bias resident in VMEM for every batch tile; constant
        # index_map + single buffering (no pointless double-buffer copy).
        nd = arr.ndim
        return pl.BlockSpec(arr.shape, lambda i, _nd=nd: (0,) * _nd,
                            pipeline_mode=pl.Buffered(1))

    param_order = ("w1", "b1", "w2", "b2", "w3", "b3", "w4", "b4", "w5", "b5")
    in_specs = [pl.BlockSpec((batch_tile, Lp), lambda i: (i, 0))]
    in_specs += [resident_spec(params[name]) for name in param_order]

    out_dtype = jnp.bfloat16 if out_bf16 else jnp.float32
    out_specs = pl.BlockSpec((batch_tile, Op), lambda i: (i, 0))
    out_shape = jax.ShapeDtypeStruct((Bp, Op), out_dtype)

    # ---- static VMEM / cost bookkeeping ----------------------------------
    w_bytes = sum(int(params[k].size) * params[k].dtype.itemsize
                  for k in param_order)
    in_item = latent.dtype.itemsize
    out_item = jnp.dtype(out_dtype).itemsize
    io_bytes = 2 * batch_tile * Lp * in_item + 2 * batch_tile * Op * out_item
    max_feat = max(Lp, Op, *(params[f"w{i}"].shape[1] for i in range(1, 6)))
    act_bytes = 6 * batch_tile * max_feat * 4       # live f32 intermediates
    needed = w_bytes + io_bytes + act_bytes
    vmem_limit = int(min(max(2 * needed + (4 << 20), 32 << 20), 64 << 20))

    flops = 2 * Bp * sum(params[f"w{i}"].shape[0] * params[f"w{i}"].shape[1]
                         for i in range(1, 6))
    bytes_accessed = Bp * Lp * in_item + Bp * Op * out_item + w_bytes
    cost = pl.CostEstimate(flops=flops, transcendentals=0,
                           bytes_accessed=bytes_accessed)

    out = pl.pallas_call(
        decoder_kernel,
        out_shape=out_shape,
        grid_spec=pltpu.PrefetchScalarGridSpec(
            num_scalar_prefetch=0,
            grid=grid,
            in_specs=in_specs,
            out_specs=out_specs,
        ),
        compiler_params=pltpu.CompilerParams(
            dimension_semantics=("parallel",),
            vmem_limit_bytes=vmem_limit),
        cost_estimate=cost,
    )(latent, *(params[name] for name in param_order))

    return out[:B, :output_size]


# --------------------------------------------------------------------------
# Reference + synthetic init
# --------------------------------------------------------------------------
def init_params(key, latent_length, hidden4, hidden3, hidden2, hidden1,
                output_size):
    """Deterministic synthetic init (kaiming-uniform-like weights, zero bias),
    matching the PyTorch module's Linear layout (stored as (in, out))."""
    dims = [(latent_length, hidden4), (hidden4, hidden3), (hidden3, hidden2),
            (hidden2, hidden1), (hidden1, output_size)]
    params = {}
    keys = jax.random.split(key, len(dims))
    for idx, (k, (din, dout)) in enumerate(zip(keys, dims), start=1):
        bound = jnp.sqrt(6.0 / din)
        params[f"w{idx}"] = jax.random.uniform(
            k, (din, dout), jnp.float32, minval=-bound, maxval=bound)
        params[f"b{idx}"] = jnp.zeros((1, dout), jnp.float32)
    return params


def decoder_ref(latent, params):
    """Pure-JAX reference matching PyTorch Decoder.forward (f32)."""
    h = latent
    for n in ("1", "2", "3", "4"):
        h = jnp.maximum(h @ params["w" + n] + params["b" + n], 0.0)
    return h @ params["w5"] + params["b5"]


# --------------------------------------------------------------------------
if __name__ == "__main__":
    key = jax.random.PRNGKey(0)
    k_par, k_x, k_x2 = jax.random.split(key, 3)

    latent_length, h4, h3, h2, h1 = 16, 32, 64, 64, 128

    # --- Test 1: f32 MXU path, single grid step, tight tolerance ----------
    B, out_size = 16, 128
    params = init_params(k_par, latent_length, h4, h3, h2, h1, out_size)
    latent = jax.random.normal(k_x, (B, latent_length), jnp.float32)

    prep_f32 = prepare_params(params, mxu_bf16=False)
    out = decoder_forward(latent, prep_f32, output_size=out_size)
    jax.block_until_ready(out)
    ref = decoder_ref(latent, params)
    assert out.shape == ref.shape == (B, out_size)
    assert jnp.allclose(out, ref, atol=1e-4, rtol=1e-4)

    # --- Test 2: default bf16 MXU path, multi-step grid, ragged batch,
    #             non-128-multiple output dim (exercises padding + slicing) -
    B2, out_size2 = 40, 100
    params2 = init_params(k_par, latent_length, h4, h3, h2, h1, out_size2)
    latent2 = jax.random.normal(k_x2, (B2, latent_length), jnp.float32)

    prep_bf16 = prepare_params(params2, mxu_bf16=True)
    out2 = decoder_forward(latent2, prep_bf16, output_size=out_size2,
                           batch_tile=16)
    jax.block_until_ready(out2)
    ref2 = decoder_ref(latent2, params2)
    assert out2.shape == ref2.shape == (B2, out_size2)
    # bf16 operand quantization -> loose tolerance on the fast path.
    assert jnp.allclose(out2, ref2, atol=2e-1, rtol=5e-2)

    print("KERNEL_OK")
</pallas_src>

<mosaic_0001>
module attributes {stable_mosaic.version = 11 : i64} {
  func.func @decoder_kernel(%arg0: i32, %arg1: memref<16x128xf32, #tpu.memory_space<vmem>>, %arg2: memref<128x128xf32, #tpu.memory_space<vmem>>, %arg3: memref<1x128xf32, #tpu.memory_space<vmem>>, %arg4: memref<128x128xf32, #tpu.memory_space<vmem>>, %arg5: memref<1x128xf32, #tpu.memory_space<vmem>>, %arg6: memref<128x128xf32, #tpu.memory_space<vmem>>, %arg7: memref<1x128xf32, #tpu.memory_space<vmem>>, %arg8: memref<128x128xf32, #tpu.memory_space<vmem>>, %arg9: memref<1x128xf32, #tpu.memory_space<vmem>>, %arg10: memref<128x128xf32, #tpu.memory_space<vmem>>, %arg11: memref<1x128xf32, #tpu.memory_space<vmem>>, %arg12: memref<16x128xf32, #tpu.memory_space<vmem>>) attributes {dimension_semantics = [#tpu.dimension_semantics<parallel>], iteration_bounds = array<i64: 1>, scalar_prefetch = 0 : i64, scratch_operands = 0 : i64, tpu.core_type = #tpu.core_type<tc>, window_params = [{transform_indices = @transform_0, window_bounds = array<i64: 16, 128>}, {pipeline_mode = #tpu.pipeline_mode<synchronous>, transform_indices = @transform_1, window_bounds = array<i64: 128, 128>}, {pipeline_mode = #tpu.pipeline_mode<synchronous>, transform_indices = @transform_2, window_bounds = array<i64: 1, 128>}, {pipeline_mode = #tpu.pipeline_mode<synchronous>, transform_indices = @transform_3, window_bounds = array<i64: 128, 128>}, {pipeline_mode = #tpu.pipeline_mode<synchronous>, transform_indices = @transform_4, window_bounds = array<i64: 1, 128>}, {pipeline_mode = #tpu.pipeline_mode<synchronous>, transform_indices = @transform_5, window_bounds = array<i64: 128, 128>}, {pipeline_mode = #tpu.pipeline_mode<synchronous>, transform_indices = @transform_6, window_bounds = array<i64: 1, 128>}, {pipeline_mode = #tpu.pipeline_mode<synchronous>, transform_indices = @transform_7, window_bounds = array<i64: 128, 128>}, {pipeline_mode = #tpu.pipeline_mode<synchronous>, transform_indices = @transform_8, window_bounds = array<i64: 1, 128>}, {pipeline_mode = #tpu.pipeline_mode<synchronous>, transform_indices = @transform_9, window_bounds = array<i64: 128, 128>}, {pipeline_mode = #tpu.pipeline_mode<synchronous>, transform_indices = @transform_10, window_bounds = array<i64: 1, 128>}, {transform_indices = @transform_11, window_bounds = array<i64: 16, 128>}]} {
    %c0 = arith.constant 0 : index
    %c0_0 = arith.constant 0 : index
    %0 = vector.load %arg1[%c0, %c0_0] : memref<16x128xf32, #tpu.memory_space<vmem>>, vector<16x128xf32>
    %c0_1 = arith.constant 0 : index
    %c0_2 = arith.constant 0 : index
    %1 = vector.load %arg2[%c0_1, %c0_2] : memref<128x128xf32, #tpu.memory_space<vmem>>, vector<128x128xf32>
    %cst = arith.constant dense<0.000000e+00> : vector<16x128xf32>
    %2 = tpu.matmul %0, %1, %cst {dimension_numbers = #tpu.dot_dimension_numbers<[1], [0], [0], [1], [0, 0, 1, 1], [], []>} : vector<16x128xf32>, vector<128x128xf32>, vector<16x128xf32> -> vector<16x128xf32>
    %c0_3 = arith.constant 0 : index
    %c0_4 = arith.constant 0 : index
    %3 = vector.load %arg3[%c0_3, %c0_4] : memref<1x128xf32, #tpu.memory_space<vmem>>, vector<1x128xf32>
    %4 = vector.broadcast %3 : vector<1x128xf32> to vector<16x128xf32>
    %5 = arith.addf %2, %4 : vector<16x128xf32>
    %cst_5 = arith.constant 0.000000e+00 : f32
    %6 = vector.broadcast %cst_5 : f32 to vector<16x128xf32>
    %7 = arith.maximumf %5, %6 : vector<16x128xf32>
    %c0_6 = arith.constant 0 : index
    %c0_7 = arith.constant 0 : index
    %8 = vector.load %arg4[%c0_6, %c0_7] : memref<128x128xf32, #tpu.memory_space<vmem>>, vector<128x128xf32>
    %cst_8 = arith.constant dense<0.000000e+00> : vector<16x128xf32>
    %9 = tpu.matmul %7, %8, %cst_8 {dimension_numbers = #tpu.dot_dimension_numbers<[1], [0], [0], [1], [0, 0, 1, 1], [], []>} : vector<16x128xf32>, vector<128x128xf32>, vector<16x128xf32> -> vector<16x128xf32>
    %c0_9 = arith.constant 0 : index
    %c0_10 = arith.constant 0 : index
    %10 = vector.load %arg5[%c0_9, %c0_10] : memref<1x128xf32, #tpu.memory_space<vmem>>, vector<1x128xf32>
    %11 = vector.broadcast %10 : vector<1x128xf32> to vector<16x128xf32>
    %12 = arith.addf %9, %11 : vector<16x128xf32>
    %cst_11 = arith.constant 0.000000e+00 : f32
    %13 = vector.broadcast %cst_11 : f32 to vector<16x128xf32>
    %14 = arith.maximumf %12, %13 : vector<16x128xf32>
    %c0_12 = arith.constant 0 : index
    %c0_13 = arith.constant 0 : index
    %15 = vector.load %arg6[%c0_12, %c0_13] : memref<128x128xf32, #tpu.memory_space<vmem>>, vector<128x128xf32>
    %cst_14 = arith.constant dense<0.000000e+00> : vector<16x128xf32>
    %16 = tpu.matmul %14, %15, %cst_14 {dimension_numbers = #tpu.dot_dimension_numbers<[1], [0], [0], [1], [0, 0, 1, 1], [], []>} : vector<16x128xf32>, vector<128x128xf32>, vector<16x128xf32> -> vector<16x128xf32>
    %c0_15 = arith.constant 0 : index
    %c0_16 = arith.constant 0 : index
    %17 = vector.load %arg7[%c0_15, %c0_16] : memref<1x128xf32, #tpu.memory_space<vmem>>, vector<1x128xf32>
    %18 = vector.broadcast %17 : vector<1x128xf32> to vector<16x128xf32>
    %19 = arith.addf %16, %18 : vector<16x128xf32>
    %cst_17 = arith.constant 0.000000e+00 : f32
    %20 = vector.broadcast %cst_17 : f32 to vector<16x128xf32>
    %21 = arith.maximumf %19, %20 : vector<16x128xf32>
    %c0_18 = arith.constant 0 : index
    %c0_19 = arith.constant 0 : index
    %22 = vector.load %arg8[%c0_18, %c0_19] : memref<128x128xf32, #tpu.memory_space<vmem>>, vector<128x128xf32>
    %cst_20 = arith.constant dense<0.000000e+00> : vector<16x128xf32>
    %23 = tpu.matmul %21, %22, %cst_20 {dimension_numbers = #tpu.dot_dimension_numbers<[1], [0], [0], [1], [0, 0, 1, 1], [], []>} : vector<16x128xf32>, vector<128x128xf32>, vector<16x128xf32> -> vector<16x128xf32>
    %c0_21 = arith.constant 0 : index
    %c0_22 = arith.constant 0 : index
    %24 = vector.load %arg9[%c0_21, %c0_22] : memref<1x128xf32, #tpu.memory_space<vmem>>, vector<1x128xf32>
    %25 = vector.broadcast %24 : vector<1x128xf32> to vector<16x128xf32>
    %26 = arith.addf %23, %25 : vector<16x128xf32>
    %cst_23 = arith.constant 0.000000e+00 : f32
    %27 = vector.broadcast %cst_23 : f32 to vector<16x128xf32>
    %28 = arith.maximumf %26, %27 : vector<16x128xf32>
    %c0_24 = arith.constant 0 : index
    %c0_25 = arith.constant 0 : index
    %29 = vector.load %arg10[%c0_24, %c0_25] : memref<128x128xf32, #tpu.memory_space<vmem>>, vector<128x128xf32>
    %cst_26 = arith.constant dense<0.000000e+00> : vector<16x128xf32>
    %30 = tpu.matmul %28, %29, %cst_26 {dimension_numbers = #tpu.dot_dimension_numbers<[1], [0], [0], [1], [0, 0, 1, 1], [], []>} : vector<16x128xf32>, vector<128x128xf32>, vector<16x128xf32> -> vector<16x128xf32>
    %c0_27 = arith.constant 0 : index
    %c0_28 = arith.constant 0 : index
    %31 = vector.load %arg11[%c0_27, %c0_28] : memref<1x128xf32, #tpu.memory_space<vmem>>, vector<1x128xf32>
    %32 = vector.broadcast %31 : vector<1x128xf32> to vector<16x128xf32>
    %33 = arith.addf %30, %32 : vector<16x128xf32>
    %c0_29 = arith.constant 0 : index
    %c0_30 = arith.constant 0 : index
    %34 = vector.load %arg12[%c0_29, %c0_30] : memref<16x128xf32, #tpu.memory_space<vmem>>, vector<16x128xf32>
    tpu.vector_store %arg12[%c0_29, %c0_30], %33 {strides = array<i32>} : memref<16x128xf32, #tpu.memory_space<vmem>>, vector<16x128xf32>,
    return
  }
  func.func @transform_0(%arg0: i32) -> (i32, i32) {
    %c0_i32 = arith.constant 0 : i32
    %c0_i32_0 = arith.constant 0 : i32
    return %arg0, %c0_i32 : i32, i32
  }
  func.func @transform_1(%arg0: i32) -> (i32, i32) {
    %c0_i32 = arith.constant 0 : i32
    %c0_i32_0 = arith.constant 0 : i32
    %c0_i32_1 = arith.constant 0 : i32
    return %c0_i32, %c0_i32_0 : i32, i32
  }
  func.func @transform_2(%arg0: i32) -> (i32, i32) {
    %c0_i32 = arith.constant 0 : i32
    %c0_i32_0 = arith.constant 0 : i32
    %c0_i32_1 = arith.constant 0 : i32
    return %c0_i32, %c0_i32_0 : i32, i32
  }
  func.func @transform_3(%arg0: i32) -> (i32, i32) {
    %c0_i32 = arith.constant 0 : i32
    %c0_i32_0 = arith.constant 0 : i32
    %c0_i32_1 = arith.constant 0 : i32
    return %c0_i32, %c0_i32_0 : i32, i32
  }
  func.func @transform_4(%arg0: i32) -> (i32, i32) {
    %c0_i32 = arith.constant 0 : i32
    %c0_i32_0 = arith.constant 0 : i32
    %c0_i32_1 = arith.constant 0 : i32
    return %c0_i32, %c0_i32_0 : i32, i32
  }
  func.func @transform_5(%arg0: i32) -> (i32, i32) {
    %c0_i32 = arith.constant 0 : i32
    %c0_i32_0 = arith.constant 0 : i32
    %c0_i32_1 = arith.constant 0 : i32
    return %c0_i32, %c0_i32_0 : i32, i32
  }
  func.func @transform_6(%arg0: i32) -> (i32, i32) {
    %c0_i32 = arith.constant 0 : i32
    %c0_i32_0 = arith.constant 0 : i32
    %c0_i32_1 = arith.constant 0 : i32
    return %c0_i32, %c0_i32_0 : i32, i32
  }
  func.func @transform_7(%arg0: i32) -> (i32, i32) {
    %c0_i32 = arith.constant 0 : i32
    %c0_i32_0 = arith.constant 0 : i32
    %c0_i32_1 = arith.constant 0 : i32
    return %c0_i32, %c0_i32_0 : i32, i32
  }
  func.func @transform_8(%arg0: i32) -> (i32, i32) {
    %c0_i32 = arith.constant 0 : i32
    %c0_i32_0 = arith.constant 0 : i32
    %c0_i32_1 = arith.constant 0 : i32
    return %c0_i32, %c0_i32_0 : i32, i32
  }
  func.func @transform_9(%arg0: i32) -> (i32, i32) {
    %c0_i32 = arith.constant 0 : i32
    %c0_i32_0 = arith.constant 0 : i32
    %c0_i32_1 = arith.constant 0 : i32
    return %c0_i32, %c0_i32_0 : i32, i32
  }
  func.func @transform_10(%arg0: i32) -> (i32, i32) {
    %c0_i32 = arith.constant 0 : i32
    %c0_i32_0 = arith.constant 0 : i32
    %c0_i32_1 = arith.constant 0 : i32
    return %c0_i32, %c0_i32_0 : i32, i32
  }
  func.func @transform_11(%arg0: i32) -> (i32, i32) {
    %c0_i32 = arith.constant 0 : i32
    %c0_i32_0 = arith.constant 0 : i32
    return %arg0, %c0_i32 : i32, i32
  }
}

</mosaic_0001>

<llo_original>
// kernel: decoder_forward.1
$region0: #{decoder_forward.1}
  #allocation0 [shape = 'u32[]', space=smem, size = 0x4, offset = 0x4, fixed_abs, tag = 'smem constant byte address 0x4 - core index']
  #allocation1 [shape = 'u32[144,128]{1,0:T(1,128)}', space=vmem, size = 0x12000, scoped, tag = 'internal scratch']
  %s0 = inlined_call_operand.vmem [shape: f32[16,128], index: 0, kind: input, shape index: {}]
  %s1 = inlined_call_operand.hbm [shape: f32[128,128], index: 1, kind: input, shape index: {}]
  %s2 = inlined_call_operand.vmem [shape: f32[1,128], index: 2, kind: input, shape index: {}]
  %s3 = inlined_call_operand.hbm [shape: f32[128,128], index: 3, kind: input, shape index: {}]
  %s4 = inlined_call_operand.vmem [shape: f32[1,128], index: 4, kind: input, shape index: {}]
  %s5 = inlined_call_operand.hbm [shape: f32[128,128], index: 5, kind: input, shape index: {}]
  %s6 = inlined_call_operand.vmem [shape: f32[1,128], index: 6, kind: input, shape index: {}]
  %s7 = inlined_call_operand.hbm [shape: f32[128,128], index: 7, kind: input, shape index: {}]
  %s8 = inlined_call_operand.vmem [shape: f32[1,128], index: 8, kind: input, shape index: {}]
  %s9 = inlined_call_operand.hbm [shape: f32[128,128], index: 9, kind: input, shape index: {}]
  %s10 = inlined_call_operand.vmem [shape: f32[1,128], index: 10, kind: input, shape index: {}]
  %s11 = inlined_call_operand.hbm [shape: f32[16,128], index: 11, kind: output, shape index: {}]
  %s12 = sld [smem:[#allocation0]]
  $region74: #{decoder_forward.1} parent=0
    _
  %s14 = ssub.s32 1, %s12
  %s15 = scalar_select 0, %s14, %s12
  $region1: #{decoder_forward.1} parent=0
    #allocation2 [shape = 'u8[65536]{0}', space=vmem, size = 0x10000, scoped, tag = 'input window, operand 1, single buffered']
    #allocation3 [shape = 's32[1]{0}', space=sflag, size = 0x4, scoped, tag = 'scoped memory for decoder_forward.1']
    #allocation4 [shape = 's32[1]{0}', space=sflag, size = 0x4, scoped, tag = 'scoped memory for decoder_forward.1']
    #allocation5 [shape = 'u8[65536]{0}', space=vmem, size = 0x10000, scoped, tag = 'input window, operand 3, single buffered']
    #allocation6 [shape = 's32[1]{0}', space=sflag, size = 0x4, scoped, tag = 'scoped memory for decoder_forward.1']
    #allocation7 [shape = 'u8[65536]{0}', space=vmem, size = 0x10000, scoped, tag = 'input window, operand 5, single buffered']
    #allocation8 [shape = 'u8[65536]{0}', space=vmem, size = 0x10000, scoped, tag = 'input window, operand 7, single buffered']
    #allocation9 [shape = 's32[1]{0}', space=sflag, size = 0x4, scoped, tag = 'scoped memory for decoder_forward.1']
    #allocation10 [shape = 'u8[65536]{0}', space=vmem, size = 0x10000, scoped, tag = 'input window, operand 9, single buffered']
    #allocation11 [shape = 'u8[8192]{0}', space=vmem, size = 0x2000, scoped, tag = 'output window, operand 0, single buffered']
    %16 = vsyncpa [#allocation3], 0
    %17 = vsyncpa [#allocation6], 0
    %18 = vsyncpa [#allocation9], 0
    %19 = vsyncpa [#allocation4], 0
    // Predicated region
    $region2: #{decoder_forward.1} parent=1 // pred_check
      _
    $region3: #{decoder_forward.1} parent=1 // pred_check_branch
      %21 = sbr.rel (0) target = $region5
    $region4: #{decoder_forward.1} parent=1 // pred_region
      _
    $region5: #{decoder_forward.1} parent=1 // pred_fallthru
      _
    // Predicated region
    $region6: #{decoder_forward.1} parent=1 // pred_check
      _
    $region7: #{decoder_forward.1} parent=1 // pred_check_branch
      %23 = sbr.rel (0) target = $region9
    $region8: #{decoder_forward.1} parent=1 // pred_region
      %s25 = ssub.s32 2048, 2048
      %26 = vsyncadd [#allocation3], %s25
      %s27 = sshll.u32 [#allocation2], 4
      %s28 = int_to_ptr.vmem [resolvable:$true] %s27
      %33 = dma.hbm_to_vmem [thread:$0]  %s1, 2048, %s28, [#allocation3], 128, 128, 8
    $region9: #{decoder_forward.1} parent=1 // pred_fallthru
      _
    // Predicated region
    $region10: #{decoder_forward.1} parent=1 // pred_check
      _
    $region11: #{decoder_forward.1} parent=1 // pred_check_branch
      %35 = sbr.rel (0) target = $region13
    $region12: #{decoder_forward.1} parent=1 // pred_region
      _
    $region13: #{decoder_forward.1} parent=1 // pred_fallthru
      _
    // Predicated region
    $region14: #{decoder_forward.1} parent=1 // pred_check
      _
    $region15: #{decoder_forward.1} parent=1 // pred_check_branch
      %37 = sbr.rel (0) target = $region17
    $region16: #{decoder_forward.1} parent=1 // pred_region
      %s39 = ssub.s32 2048, 2048
      %40 = vsyncadd [#allocation6], %s39
      %s41 = sshll.u32 [#allocation5], 4
      %s42 = int_to_ptr.vmem [resolvable:$true] %s41
      %47 = dma.hbm_to_vmem [thread:$0]  %s3, 2048, %s42, [#allocation6], 128, 128, 8
    $region17: #{decoder_forward.1} parent=1 // pred_fallthru
      _
    // Predicated region
    $region18: #{decoder_forward.1} parent=1 // pred_check
      _
    $region19: #{decoder_forward.1} parent=1 // pred_check_branch
      %49 = sbr.rel (0) target = $region21
    $region20: #{decoder_forward.1} parent=1 // pred_region
      _
    $region21: #{decoder_forward.1} parent=1 // pred_fallthru
      _
    // Predicated region
    $region22: #{decoder_forward.1} parent=1 // pred_check
      _
    $region23: #{decoder_forward.1} parent=1 // pred_check_branch
      %51 = sbr.rel (0) target = $region25
    $region24: #{decoder_forward.1} parent=1 // pred_region
      %s53 = ssub.s32 2048, 2048
      %54 = vsyncadd [#allocation6], %s53
      %s55 = sshll.u32 [#allocation7], 4
      %s56 = int_to_ptr.vmem [resolvable:$true] %s55
      %61 = dma.hbm_to_vmem [thread:$0]  %s5, 2048, %s56, [#allocation6], 128, 128, 8
    $region25: #{decoder_forward.1} parent=1 // pred_fallthru
      _
    // Predicated region
    $region26: #{decoder_forward.1} parent=1 // pred_check
      _
    $region27: #{decoder_forward.1} parent=1 // pred_check_branch
      %63 = sbr.rel (0) target = $region29
    $region28: #{decoder_forward.1} parent=1 // pred_region
      _
    $region29: #{decoder_forward.1} parent=1 // pred_fallthru
      _
    // Predicated region
    $region30: #{decoder_forward.1} parent=1 // pred_check
      _
    $region31: #{decoder_forward.1} parent=1 // pred_check_branch
      %65 = sbr.rel (0) target = $region33
    $region32: #{decoder_forward.1} parent=1 // pred_region
      %s67 = ssub.s32 2048, 2048
      %68 = vsyncadd [#allocation9], %s67
      %s69 = sshll.u32 [#allocation8], 4
      %s70 = int_to_ptr.vmem [resolvable:$true] %s69
      %75 = dma.hbm_to_vmem [thread:$0]  %s7, 2048, %s70, [#allocation9], 128, 128, 8
    $region33: #{decoder_forward.1} parent=1 // pred_fallthru
      _
    // Predicated region
    $region34: #{decoder_forward.1} parent=1 // pred_check
      _
    $region35: #{decoder_forward.1} parent=1 // pred_check_branch
      %77 = sbr.rel (0) target = $region37
    $region36: #{decoder_forward.1} parent=1 // pred_region
      _
    $region37: #{decoder_forward.1} parent=1 // pred_fallthru
      _
    // Predicated region
    $region38: #{decoder_forward.1} parent=1 // pred_check
      _
    $region39: #{decoder_forward.1} parent=1 // pred_check_branch
      %79 = sbr.rel (0) target = $region41
    $region40: #{decoder_forward.1} parent=1 // pred_region
      %s81 = ssub.s32 2048, 2048
      %82 = vsyncadd [#allocation9], %s81
      %s83 = sshll.u32 [#allocation10], 4
      %s84 = int_to_ptr.vmem [resolvable:$true] %s83
      %89 = dma.hbm_to_vmem [thread:$0]  %s9, 2048, %s84, [#allocation9], 128, 128, 8
    $region41: #{decoder_forward.1} parent=1 // pred_fallthru
      _
    // Predicated region
    $region42: #{decoder_forward.1} parent=1 // pred_check
      _
    $region43: #{decoder_forward.1} parent=1 // pred_check_branch
      %91 = sbr.rel (0) target = $region45
    $region44: #{decoder_forward.1} parent=1 // pred_region
      _
    $region45: #{decoder_forward.1} parent=1 // pred_fallthru
      _
    // Predicated region
    $region46: #{decoder_forward.1} parent=1 // pred_check
      _
    $region47: #{decoder_forward.1} parent=1 // pred_check_branch
      %93 = sbr.rel (0) target = $region49
    $region48: #{decoder_forward.1} parent=1 // pred_region
      %94 = dma.done [#allocation3], 2048
    $region49: #{decoder_forward.1} parent=1 // pred_fallthru
      _
    // Predicated region
    $region50: #{decoder_forward.1} parent=1 // pred_check
      _
    $region51: #{decoder_forward.1} parent=1 // pred_check_branch
      %96 = sbr.rel (0) target = $region53
    $region52: #{decoder_forward.1} parent=1 // pred_region
      %97 = dma.done [#allocation6], 2048
    $region53: #{decoder_forward.1} parent=1 // pred_fallthru
      _
    // Predicated region
    $region54: #{decoder_forward.1} parent=1 // pred_check
      _
    $region55: #{decoder_forward.1} parent=1 // pred_check_branch
      %99 = sbr.rel (0) target = $region57
    $region56: #{decoder_forward.1} parent=1 // pred_region
      %100 = dma.done [#allocation6], 2048
    $region57: #{decoder_forward.1} parent=1 // pred_fallthru
      _
    // Predicated region
    $region58: #{decoder_forward.1} parent=1 // pred_check
      _
    $region59: #{decoder_forward.1} parent=1 // pred_check_branch
      %102 = sbr.rel (0) target = $region61
    $region60: #{decoder_forward.1} parent=1 // pred_region
      %103 = dma.done [#allocation9], 2048
    $region61: #{decoder_forward.1} parent=1 // pred_fallthru
      _
    // Predicated region
    $region62: #{decoder_forward.1} parent=1 // pred_check
      _
    $region63: #{decoder_forward.1} parent=1 // pred_check_branch
      %105 = sbr.rel (0) target = $region65
    $region64: #{decoder_forward.1} parent=1 // pred_region
      %106 = dma.done [#allocation9], 2048
    $region65: #{decoder_forward.1} parent=1 // pred_fallthru
      _
    %v107 = vld [vmem:[%s0] sm:$0xff]
    %v108 = vld [vmem:[%s0 + $0x8] sm:$0xff]
    %v109 = vld [vmem:[#allocation2] sm:$0xff]
    %v110 = vld [vmem:[#allocation2 + $0x8] sm:$0xff]
    %v111 = vld [vmem:[#allocation2 + $0x10] sm:$0xff]
    %v112 = vld [vmem:[#allocation2 + $0x18] sm:$0xff]
    %v113 = vld [vmem:[#allocation2 + $0x20] sm:$0xff]
    %v114 = vld [vmem:[#allocation2 + $0x28] sm:$0xff]
    %v115 = vld [vmem:[#allocation2 + $0x30] sm:$0xff]
    %v116 = vld [vmem:[#allocation2 + $0x38] sm:$0xff]
    %v117 = vld [vmem:[#allocation2 + $0x40] sm:$0xff]
    %v118 = vld [vmem:[#allocation2 + $0x48] sm:$0xff]
    %v119 = vld [vmem:[#allocation2 + $0x50] sm:$0xff]
    %v120 = vld [vmem:[#allocation2 + $0x58] sm:$0xff]
    %v121 = vld [vmem:[#allocation2 + $0x60] sm:$0xff]
    %v122 = vld [vmem:[#allocation2 + $0x68] sm:$0xff]
    %v123 = vld [vmem:[#allocation2 + $0x70] sm:$0xff]
    %v124 = vld [vmem:[#allocation2 + $0x78] sm:$0xff]
    %v125 = vld [vmem:[%s2] sm:$0x1]
    %v127 = vlaneseq
    %v128 = vshrl.u32 %v127, 7
    %v129 = vsub.s32 0, %v128
    %v130 = vrot.slane %v125, %v129
    %132 = vmatprep.subr.mxu0 0.0
    %133 = vmatpush1.msra.mxu0 %v109
    %134 = vmatprep.subr.mxu0 0.0
    %135 = vmatpush1.msra.mxu0 %v110
    %136 = vmatprep.subr.mxu0 0.0
    %137 = vmatpush1.msra.mxu0 %v111
    %138 = vmatprep.subr.mxu0 0.0
    %139 = vmatpush1.msra.mxu0 %v112
    %140 = vmatprep.subr.mxu0 0.0
    %141 = vmatpush1.msra.mxu0 %v113
    %142 = vmatprep.subr.mxu0 0.0
    %143 = vmatpush1.msra.mxu0 %v114
    %144 = vmatprep.subr.mxu0 0.0
    %145 = vmatpush1.msra.mxu0 %v115
    %146 = vmatprep.subr.mxu0 0.0
    %147 = vmatpush1.msra.mxu0 %v116
    %148 = vmatprep.subr.mxu0 0.0
    %149 = vmatpush1.msra.mxu0 %v117
    %150 = vmatprep.subr.mxu0 0.0
    %151 = vmatpush1.msra.mxu0 %v118
    %152 = vmatprep.subr.mxu0 0.0
    %153 = vmatpush1.msra.mxu0 %v119
    %154 = vmatprep.subr.mxu0 0.0
    %155 = vmatpush1.msra.mxu0 %v120
    %156 = vmatprep.subr.mxu0 0.0
    %157 = vmatpush1.msra.mxu0 %v121
    %158 = vmatprep.subr.mxu0 0.0
    %159 = vmatpush1.msra.mxu0 %v122
    %160 = vmatprep.subr.mxu0 0.0
    %161 = vmatpush1.msra.mxu0 %v123
    %162 = vmatprep.subr.mxu0 0.0
    %163 = vmatpush1.msra.mxu0 %v124
    %164 = vmatprep.subr.mxu0 0.0
    %165 = vmatpush1.msra.mxu0 0.0
    %166 = vmatprep.subr.mxu0 0.0
    %167 = vmatpush1.msra.mxu0 0.0
    %168 = vmatprep.subr.mxu0 0.0
    %169 = vmatpush1.msra.mxu0 0.0
    %170 = vmatprep.subr.mxu0 0.0
    %171 = vmatpush1.msra.mxu0 0.0
    %172 = vmatprep.subr.mxu0 0.0
    %173 = vmatpush1.msra.mxu0 0.0
    %174 = vmatprep.subr.mxu0 0.0
    %175 = vmatpush1.msra.mxu0 0.0
    %176 = vmatprep.subr.mxu0 0.0
    %177 = vmatpush1.msra.mxu0 0.0
    %178 = vmatprep.subr.mxu0 0.0
    %179 = vmatpush1.msra.mxu0 0.0
    %180 = vmatprep.subr.mxu0 0.0
    %181 = vmatpush1.msra.mxu0 0.0
    %182 = vmatprep.subr.mxu0 0.0
    %183 = vmatpush1.msra.mxu0 0.0
    %184 = vmatprep.subr.mxu0 0.0
    %185 = vmatpush1.msra.mxu0 0.0
    %186 = vmatprep.subr.mxu0 0.0
    %187 = vmatpush1.msra.mxu0 0.0
    %188 = vmatprep.subr.mxu0 0.0
    %189 = vmatpush1.msra.mxu0 0.0
    %190 = vmatprep.subr.mxu0 0.0
    %191 = vmatpush1.msra.mxu0 0.0
    %192 = vmatprep.subr.mxu0 0.0
    %193 = vmatpush1.msra.mxu0 0.0
    %194 = vmatprep.subr.mxu0 0.0
    %195 = vmatpush1.msra.mxu0 0.0
    %196 = vmatprep.mubr.f32.mxu0 0.0
    %197 = vmatmul.mubr.f32.gmra.mrb[0].mxu0 %v107
    %v198 = vpop.f32.mrb[0].mxu0
    %v199 = vadd.f32 %v130, %v198
    %v200 = vpop.f32.mrb[0].mxu0
    %201 = vmatprep.mubr.f32.mxu0 0.0
    %202 = vmatmul.mubr.f32.gmra.mrb[0].mxu0 %v108
    %v203 = vpop.f32.mrb[0].mxu0
    %v204 = vadd.f32 %v130, %v203
    %v205 = vpop.f32.mrb[0].mxu0
    %206 = vdwg.mxu0
    %v207 = vmax.f32 %v199, 0.0
    %v208 = vmax.f32 %v204, 0.0
    %v209 = vld [vmem:[#allocation5] sm:$0xff]
    %v210 = vld [vmem:[#allocation5 + $0x8] sm:$0xff]
    %v211 = vld [vmem:[#allocation5 + $0x10] sm:$0xff]
    %v212 = vld [vmem:[#allocation5 + $0x18] sm:$0xff]
    %v213 = vld [vmem:[#allocation5 + $0x20] sm:$0xff]
    %v214 = vld [vmem:[#allocation5 + $0x28] sm:$0xff]
    %v215 = vld [vmem:[#allocation5 + $0x30] sm:$0xff]
    %v216 = vld [vmem:[#allocation5 + $0x38] sm:$0xff]
    %v217 = vld [vmem:[#allocation5 + $0x40] sm:$0xff]
    %v218 = vld [vmem:[#allocation5 + $0x48] sm:$0xff]
    %v219 = vld [vmem:[#allocation5 + $0x50] sm:$0xff]
    %v220 = vld [vmem:[#allocation5 + $0x58] sm:$0xff]
    %v221 = vld [vmem:[#allocation5 + $0x60] sm:$0xff]
    %v222 = vld [vmem:[#allocation5 + $0x68] sm:$0xff]
    %v223 = vld [vmem:[#allocation5 + $0x70] sm:$0xff]
    %v224 = vld [vmem:[#allocation5 + $0x78] sm:$0xff]
    %v225 = vld [vmem:[%s4] sm:$0x1]
    %v227 = vlaneseq
    %v228 = vshrl.u32 %v227, 7
    %v229 = vsub.s32 0, %v228
    %v230 = vrot.slane %v225, %v229
    %232 = vmatprep.subr.mxu0 0.0
    %233 = vmatpush1.msra.mxu0 %v209
    %234 = vmatprep.subr.mxu0 0.0
    %235 = vmatpush1.msra.mxu0 %v210
    %236 = vmatprep.subr.mxu0 0.0
    %237 = vmatpush1.msra.mxu0 %v211
    %238 = vmatprep.subr.mxu0 0.0
    %239 = vmatpush1.msra.mxu0 %v212
    %240 = vmatprep.subr.mxu0 0.0
    %241 = vmatpush1.msra.mxu0 %v213
    %242 = vmatprep.subr.mxu0 0.0
    %243 = vmatpush1.msra.mxu0 %v214
    %244 = vmatprep.subr.mxu0 0.0
    %245 = vmatpush1.msra.mxu0 %v215
    %246 = vmatprep.subr.mxu0 0.0
    %247 = vmatpush1.msra.mxu0 %v216
    %248 = vmatprep.subr.mxu0 0.0
    %249 = vmatpush1.msra.mxu0 %v217
    %250 = vmatprep.subr.mxu0 0.0
    %251 = vmatpush1.msra.mxu0 %v218
    %252 = vmatprep.subr.mxu0 0.0
    %253 = vmatpush1.msra.mxu0 %v219
    %254 = vmatprep.subr.mxu0 0.0
    %255 = vmatpush1.msra.mxu0 %v220
    %256 = vmatprep.subr.mxu0 0.0
    %257 = vmatpush1.msra.mxu0 %v221
    %258 = vmatprep.subr.mxu0 0.0
    %259 = vmatpush1.msra.mxu0 %v222
    %260 = vmatprep.subr.mxu0 0.0
    %261 = vmatpush1.msra.mxu0 %v223
    %262 = vmatprep.subr.mxu0 0.0
    %263 = vmatpush1.msra.mxu0 %v224
    %264 = vmatprep.subr.mxu0 0.0
    %265 = vmatpush1.msra.mxu0 0.0
    %266 = vmatprep.subr.mxu0 0.0
    %267 = vmatpush1.msra.mxu0 0.0
    %268 = vmatprep.subr.mxu0 0.0
    %269 = vmatpush1.msra.mxu0 0.0
    %270 = vmatprep.subr.mxu0 0.0
    %271 = vmatpush1.msra.mxu0 0.0
    %272 = vmatprep.subr.mxu0 0.0
    %273 = vmatpush1.msra.mxu0 0.0
    %274 = vmatprep.subr.mxu0 0.0
    %275 = vmatpush1.msra.mxu0 0.0
    %276 = vmatprep.subr.mxu0 0.0
    %277 = vmatpush1.msra.mxu0 0.0
    %278 = vmatprep.subr.mxu0 0.0
    %279 = vmatpush1.msra.mxu0 0.0
    %280 = vmatprep.subr.mxu0 0.0
    %281 = vmatpush1.msra.mxu0 0.0
    %282 = vmatprep.subr.mxu0 0.0
    %283 = vmatpush1.msra.mxu0 0.0
    %284 = vmatprep.subr.mxu0 0.0
    %285 = vmatpush1.msra.mxu0 0.0
    %286 = vmatprep.subr.mxu0 0.0
    %287 = vmatpush1.msra.mxu0 0.0
    %288 = vmatprep.subr.mxu0 0.0
    %289 = vmatpush1.msra.mxu0 0.0
    %290 = vmatprep.subr.mxu0 0.0
    %291 = vmatpush1.msra.mxu0 0.0
    %292 = vmatprep.subr.mxu0 0.0
    %293 = vmatpush1.msra.mxu0 0.0
    %294 = vmatprep.subr.mxu0 0.0
    %295 = vmatpush1.msra.mxu0 0.0
    %296 = vmatprep.mubr.f32.mxu0 0.0
    %297 = vmatmul.mubr.f32.gmra.mrb[0].mxu0 %v207
    %v298 = vpop.f32.mrb[0].mxu0
    %v299 = vadd.f32 %v230, %v298
    %v300 = vpop.f32.mrb[0].mxu0
    %301 = vmatprep.mubr.f32.mxu0 0.0
    %302 = vmatmul.mubr.f32.gmra.mrb[0].mxu0 %v208
    %v303 = vpop.f32.mrb[0].mxu0
    %v304 = vadd.f32 %v230, %v303
    %v305 = vpop.f32.mrb[0].mxu0
    %306 = vdwg.mxu0
    %v307 = vmax.f32 %v299, 0.0
    %v308 = vmax.f32 %v304, 0.0
    %v309 = vld [vmem:[#allocation7] sm:$0xff]
    %v310 = vld [vmem:[#allocation7 + $0x8] sm:$0xff]
    %v311 = vld [vmem:[#allocation7 + $0x10] sm:$0xff]
    %v312 = vld [vmem:[#allocation7 + $0x18] sm:$0xff]
    %v313 = vld [vmem:[#allocation7 + $0x20] sm:$0xff]
    %v314 = vld [vmem:[#allocation7 + $0x28] sm:$0xff]
    %v315 = vld [vmem:[#allocation7 + $0x30] sm:$0xff]
    %v316 = vld [vmem:[#allocation7 + $0x38] sm:$0xff]
    %v317 = vld [vmem:[#allocation7 + $0x40] sm:$0xff]
    %v318 = vld [vmem:[#allocation7 + $0x48] sm:$0xff]
    %v319 = vld [vmem:[#allocation7 + $0x50] sm:$0xff]
    %v320 = vld [vmem:[#allocation7 + $0x58] sm:$0xff]
    %v321 = vld [vmem:[#allocation7 + $0x60] sm:$0xff]
    %v322 = vld [vmem:[#allocation7 + $0x68] sm:$0xff]
    %v323 = vld [vmem:[#allocation7 + $0x70] sm:$0xff]
    %v324 = vld [vmem:[#allocation7 + $0x78] sm:$0xff]
    %v325 = vld [vmem:[%s6] sm:$0x1]
    %v327 = vlaneseq
    %v328 = vshrl.u32 %v327, 7
    %v329 = vsub.s32 0, %v328
    %v330 = vrot.slane %v325, %v329
    %332 = vmatprep.subr.mxu0 0.0
    %333 = vmatpush1.msra.mxu0 %v309
    %334 = vmatprep.subr.mxu0 0.0
    %335 = vmatpush1.msra.mxu0 %v310
    %336 = vmatprep.subr.mxu0 0.0
    %337 = vmatpush1.msra.mxu0 %v311
    %338 = vmatprep.subr.mxu0 0.0
    %339 = vmatpush1.msra.mxu0 %v312
    %340 = vmatprep.subr.mxu0 0.0
    %341 = vmatpush1.msra.mxu0 %v313
    %342 = vmatprep.subr.mxu0 0.0
    %343 = vmatpush1.msra.mxu0 %v314
    %344 = vmatprep.subr.mxu0 0.0
    %345 = vmatpush1.msra.mxu0 %v315
    %346 = vmatprep.subr.mxu0 0.0
    %347 = vmatpush1.msra.mxu0 %v316
    %348 = vmatprep.subr.mxu0 0.0
    %349 = vmatpush1.msra.mxu0 %v317
    %350 = vmatprep.subr.mxu0 0.0
    %351 = vmatpush1.msra.mxu0 %v318
    %352 = vmatprep.subr.mxu0 0.0
    %353 = vmatpush1.msra.mxu0 %v319
    %354 = vmatprep.subr.mxu0 0.0
    %355 = vmatpush1.msra.mxu0 %v320
    %356 = vmatprep.subr.mxu0 0.0
    %357 = vmatpush1.msra.mxu0 %v321
    %358 = vmatprep.subr.mxu0 0.0
    %359 = vmatpush1.msra.mxu0 %v322
    %360 = vmatprep.subr.mxu0 0.0
    %361 = vmatpush1.msra.mxu0 %v323
    %362 = vmatprep.subr.mxu0 0.0
    %363 = vmatpush1.msra.mxu0 %v324
    %364 = vmatprep.subr.mxu0 0.0
    %365 = vmatpush1.msra.mxu0 0.0
    %366 = vmatprep.subr.mxu0 0.0
    %367 = vmatpush1.msra.mxu0 0.0
    %368 = vmatprep.subr.mxu0 0.0
    %369 = vmatpush1.msra.mxu0 0.0
    %370 = vmatprep.subr.mxu0 0.0
    %371 = vmatpush1.msra.mxu0 0.0
    %372 = vmatprep.subr.mxu0 0.0
    %373 = vmatpush1.msra.mxu0 0.0
    %374 = vmatprep.subr.mxu0 0.0
    %375 = vmatpush1.msra.mxu0 0.0
    %376 = vmatprep.subr.mxu0 0.0
    %377 = vmatpush1.msra.mxu0 0.0
    %378 = vmatprep.subr.mxu0 0.0
    %379 = vmatpush1.msra.mxu0 0.0
    %380 = vmatprep.subr.mxu0 0.0
    %381 = vmatpush1.msra.mxu0 0.0
    %382 = vmatprep.subr.mxu0 0.0
    %383 = vmatpush1.msra.mxu0 0.0
    %384 = vmatprep.subr.mxu0 0.0
    %385 = vmatpush1.msra.mxu0 0.0
    %386 = vmatprep.subr.mxu0 0.0
    %387 = vmatpush1.msra.mxu0 0.0
    %388 = vmatprep.subr.mxu0 0.0
    %389 = vmatpush1.msra.mxu0 0.0
    %390 = vmatprep.subr.mxu0 0.0
    %391 = vmatpush1.msra.mxu0 0.0
    %392 = vmatprep.subr.mxu0 0.0
    %393 = vmatpush1.msra.mxu0 0.0
    %394 = vmatprep.subr.mxu0 0.0
    %395 = vmatpush1.msra.mxu0 0.0
    %396 = vmatprep.mubr.f32.mxu0 0.0
    %397 = vmatmul.mubr.f32.gmra.mrb[0].mxu0 %v307
    %v398 = vpop.f32.mrb[0].mxu0
    %v399 = vadd.f32 %v330, %v398
    %v400 = vpop.f32.mrb[0].mxu0
    %401 = vmatprep.mubr.f32.mxu0 0.0
    %402 = vmatmul.mubr.f32.gmra.mrb[0].mxu0 %v308
    %v403 = vpop.f32.mrb[0].mxu0
    %v404 = vadd.f32 %v330, %v403
    %v405 = vpop.f32.mrb[0].mxu0
    %406 = vdwg.mxu0
    %v407 = vmax.f32 %v399, 0.0
    %v408 = vmax.f32 %v404, 0.0
    %v409 = vld [vmem:[#allocation8] sm:$0xff]
    %v410 = vld [vmem:[#allocation8 + $0x8] sm:$0xff]
    %v411 = vld [vmem:[#allocation8 + $0x10] sm:$0xff]
    %v412 = vld [vmem:[#allocation8 + $0x18] sm:$0xff]
    %v413 = vld [vmem:[#allocation8 + $0x20] sm:$0xff]
    %v414 = vld [vmem:[#allocation8 + $0x28] sm:$0xff]
    %v415 = vld [vmem:[#allocation8 + $0x30] sm:$0xff]
    %v416 = vld [vmem:[#allocation8 + $0x38] sm:$0xff]
    %v417 = vld [vmem:[#allocation8 + $0x40] sm:$0xff]
    %v418 = vld [vmem:[#allocation8 + $0x48] sm:$0xff]
    %v419 = vld [vmem:[#allocation8 + $0x50] sm:$0xff]
    %v420 = vld [vmem:[#allocation8 + $0x58] sm:$0xff]
    %v421 = vld [vmem:[#allocation8 + $0x60] sm:$0xff]
    %v422 = vld [vmem:[#allocation8 + $0x68] sm:$0xff]
    %v423 = vld [vmem:[#allocation8 + $0x70] sm:$0xff]
    %v424 = vld [vmem:[#allocation8 + $0x78] sm:$0xff]
    %v425 = vld [vmem:[%s8] sm:$0x1]
    %v427 = vlaneseq
    %v428 = vshrl.u32 %v427, 7
    %v429 = vsub.s32 0, %v428
    %v430 = vrot.slane %v425, %v429
    %432 = vmatprep.subr.mxu0 0.0
    %433 = vmatpush1.msra.mxu0 %v409
    %434 = vmatprep.subr.mxu0 0.0
    %435 = vmatpush1.msra.mxu0 %v410
    %436 = vmatprep.subr.mxu0 0.0
    %437 = vmatpush1.msra.mxu0 %v411
    %438 = vmatprep.subr.mxu0 0.0
    %439 = vmatpush1.msra.mxu0 %v412
    %440 = vmatprep.subr.mxu0 0.0
    %441 = vmatpush1.msra.mxu0 %v413
    %442 = vmatprep.subr.mxu0 0.0
    %443 = vmatpush1.msra.mxu0 %v414
    %444 = vmatprep.subr.mxu0 0.0
    %445 = vmatpush1.msra.mxu0 %v415
    %446 = vmatprep.subr.mxu0 0.0
    %447 = vmatpush1.msra.mxu0 %v416
    %448 = vmatprep.subr.mxu0 0.0
    %449 = vmatpush1.msra.mxu0 %v417
    %450 = vmatprep.subr.mxu0 0.0
    %451 = vmatpush1.msra.mxu0 %v418
    %452 = vmatprep.subr.mxu0 0.0
    %453 = vmatpush1.msra.mxu0 %v419
    %454 = vmatprep.subr.mxu0 0.0
    %455 = vmatpush1.msra.mxu0 %v420
    %456 = vmatprep.subr.mxu0 0.0
    %457 = vmatpush1.msra.mxu0 %v421
    %458 = vmatprep.subr.mxu0 0.0
    %459 = vmatpush1.msra.mxu0 %v422
    %460 = vmatprep.subr.mxu0 0.0
    %461 = vmatpush1.msra.mxu0 %v423
    %462 = vmatprep.subr.mxu0 0.0
    %463 = vmatpush1.msra.mxu0 %v424
    %464 = vmatprep.subr.mxu0 0.0
    %465 = vmatpush1.msra.mxu0 0.0
    %466 = vmatprep.subr.mxu0 0.0
    %467 = vmatpush1.msra.mxu0 0.0
    %468 = vmatprep.subr.mxu0 0.0
    %469 = vmatpush1.msra.mxu0 0.0
    %470 = vmatprep.subr.mxu0 0.0
    %471 = vmatpush1.msra.mxu0 0.0
    %472 = vmatprep.subr.mxu0 0.0
    %473 = vmatpush1.msra.mxu0 0.0
    %474 = vmatprep.subr.mxu0 0.0
    %475 = vmatpush1.msra.mxu0 0.0
    %476 = vmatprep.subr.mxu0 0.0
    %477 = vmatpush1.msra.mxu0 0.0
    %478 = vmatprep.subr.mxu0 0.0
    %479 = vmatpush1.msra.mxu0 0.0
    %480 = vmatprep.subr.mxu0 0.0
    %481 = vmatpush1.msra.mxu0 0.0
    %482 = vmatprep.subr.mxu0 0.0
    %483 = vmatpush1.msra.mxu0 0.0
    %484 = vmatprep.subr.mxu0 0.0
    %485 = vmatpush1.msra.mxu0 0.0
    %486 = vmatprep.subr.mxu0 0.0
    %487 = vmatpush1.msra.mxu0 0.0
    %488 = vmatprep.subr.mxu0 0.0
    %489 = vmatpush1.msra.mxu0 0.0
    %490 = vmatprep.subr.mxu0 0.0
    %491 = vmatpush1.msra.mxu0 0.0
    %492 = vmatprep.subr.mxu0 0.0
    %493 = vmatpush1.msra.mxu0 0.0
    %494 = vmatprep.subr.mxu0 0.0
    %495 = vmatpush1.msra.mxu0 0.0
    %496 = vmatprep.mubr.f32.mxu0 0.0
    %497 = vmatmul.mubr.f32.gmra.mrb[0].mxu0 %v407
    %v498 = vpop.f32.mrb[0].mxu0
    %v499 = vadd.f32 %v430, %v498
    %v500 = vpop.f32.mrb[0].mxu0
    %501 = vmatprep.mubr.f32.mxu0 0.0
    %502 = vmatmul.mubr.f32.gmra.mrb[0].mxu0 %v408
    %v503 = vpop.f32.mrb[0].mxu0
    %v504 = vadd.f32 %v430, %v503
    %v505 = vpop.f32.mrb[0].mxu0
    %506 = vdwg.mxu0
    %v507 = vmax.f32 %v499, 0.0
    %v508 = vmax.f32 %v504, 0.0
    %v509 = vld [vmem:[#allocation10] sm:$0xff]
    %v510 = vld [vmem:[#allocation10 + $0x8] sm:$0xff]
    %v511 = vld [vmem:[#allocation10 + $0x10] sm:$0xff]
    %v512 = vld [vmem:[#allocation10 + $0x18] sm:$0xff]
    %v513 = vld [vmem:[#allocation10 + $0x20] sm:$0xff]
    %v514 = vld [vmem:[#allocation10 + $0x28] sm:$0xff]
    %v515 = vld [vmem:[#allocation10 + $0x30] sm:$0xff]
    %v516 = vld [vmem:[#allocation10 + $0x38] sm:$0xff]
    %v517 = vld [vmem:[#allocation10 + $0x40] sm:$0xff]
    %v518 = vld [vmem:[#allocation10 + $0x48] sm:$0xff]
    %v519 = vld [vmem:[#allocation10 + $0x50] sm:$0xff]
    %v520 = vld [vmem:[#allocation10 + $0x58] sm:$0xff]
    %v521 = vld [vmem:[#allocation10 + $0x60] sm:$0xff]
    %v522 = vld [vmem:[#allocation10 + $0x68] sm:$0xff]
    %v523 = vld [vmem:[#allocation10 + $0x70] sm:$0xff]
    %v524 = vld [vmem:[#allocation10 + $0x78] sm:$0xff]
    %v525 = vld [vmem:[%s10] sm:$0x1]
    %v527 = vlaneseq
    %v528 = vshrl.u32 %v527, 7
    %v529 = vsub.s32 0, %v528
    %v530 = vrot.slane %v525, %v529
    %532 = vmatprep.subr.mxu0 0.0
    %533 = vmatpush1.msra.mxu0 %v509
    %534 = vmatprep.subr.mxu0 0.0
    %535 = vmatpush1.msra.mxu0 %v510
    %536 = vmatprep.subr.mxu0 0.0
    %537 = vmatpush1.msra.mxu0 %v511
    %538 = vmatprep.subr.mxu0 0.0
    %539 = vmatpush1.msra.mxu0 %v512
    %540 = vmatprep.subr.mxu0 0.0
    %541 = vmatpush1.msra.mxu0 %v513
    %542 = vmatprep.subr.mxu0 0.0
    %543 = vmatpush1.msra.mxu0 %v514
    %544 = vmatprep.subr.mxu0 0.0
    %545 = vmatpush1.msra.mxu0 %v515
    %546 = vmatprep.subr.mxu0 0.0
    %547 = vmatpush1.msra.mxu0 %v516
    %548 = vmatprep.subr.mxu0 0.0
    %549 = vmatpush1.msra.mxu0 %v517
    %550 = vmatprep.subr.mxu0 0.0
    %551 = vmatpush1.msra.mxu0 %v518
    %552 = vmatprep.subr.mxu0 0.0
    %553 = vmatpush1.msra.mxu0 %v519
    %554 = vmatprep.subr.mxu0 0.0
    %555 = vmatpush1.msra.mxu0 %v520
    %556 = vmatprep.subr.mxu0 0.0
    %557 = vmatpush1.msra.mxu0 %v521
    %558 = vmatprep.subr.mxu0 0.0
    %559 = vmatpush1.msra.mxu0 %v522
    %560 = vmatprep.subr.mxu0 0.0
    %561 = vmatpush1.msra.mxu0 %v523
    %562 = vmatprep.subr.mxu0 0.0
    %563 = vmatpush1.msra.mxu0 %v524
    %564 = vmatprep.subr.mxu0 0.0
    %565 = vmatpush1.msra.mxu0 0.0
    %566 = vmatprep.subr.mxu0 0.0
    %567 = vmatpush1.msra.mxu0 0.0
    %568 = vmatprep.subr.mxu0 0.0
    %569 = vmatpush1.msra.mxu0 0.0
    %570 = vmatprep.subr.mxu0 0.0
    %571 = vmatpush1.msra.mxu0 0.0
    %572 = vmatprep.subr.mxu0 0.0
    %573 = vmatpush1.msra.mxu0 0.0
    %574 = vmatprep.subr.mxu0 0.0
    %575 = vmatpush1.msra.mxu0 0.0
    %576 = vmatprep.subr.mxu0 0.0
    %577 = vmatpush1.msra.mxu0 0.0
    %578 = vmatprep.subr.mxu0 0.0
    %579 = vmatpush1.msra.mxu0 0.0
    %580 = vmatprep.subr.mxu0 0.0
    %581 = vmatpush1.msra.mxu0 0.0
    %582 = vmatprep.subr.mxu0 0.0
    %583 = vmatpush1.msra.mxu0 0.0
    %584 = vmatprep.subr.mxu0 0.0
    %585 = vmatpush1.msra.mxu0 0.0
    %586 = vmatprep.subr.mxu0 0.0
    %587 = vmatpush1.msra.mxu0 0.0
    %588 = vmatprep.subr.mxu0 0.0
    %589 = vmatpush1.msra.mxu0 0.0
    %590 = vmatprep.subr.mxu0 0.0
    %591 = vmatpush1.msra.mxu0 0.0
    %592 = vmatprep.subr.mxu0 0.0
    %593 = vmatpush1.msra.mxu0 0.0
    %594 = vmatprep.subr.mxu0 0.0
    %595 = vmatpush1.msra.mxu0 0.0
    %596 = vmatprep.mubr.f32.mxu0 0.0
    %597 = vmatmul.mubr.f32.gmra.mrb[0].mxu0 %v507
    %v598 = vpop.f32.mrb[0].mxu0
    %v599 = vadd.f32 %v530, %v598
    %v600 = vpop.f32.mrb[0].mxu0
    %601 = vmatprep.mubr.f32.mxu0 0.0
    %602 = vmatmul.mubr.f32.gmra.mrb[0].mxu0 %v508
    %v603 = vpop.f32.mrb[0].mxu0
    %v604 = vadd.f32 %v530, %v603
    %v605 = vpop.f32.mrb[0].mxu0
    %606 = vdwg.mxu0
    %607 = vst [vmem:[#allocation11] sm:$0xff] %v599
    %608 = vst [vmem:[#allocation11 + $0x8] sm:$0xff] %v604
    // Predicated region
    $region66: #{decoder_forward.1} parent=1 // pred_check
      _
    $region67: #{decoder_forward.1} parent=1 // pred_check_branch
      %610 = sbr.rel (0) target = $region69
    $region68: #{decoder_forward.1} parent=1 // pred_region
      %s612 = ssub.s32 256, 256
      %613 = vsyncadd [#allocation4], %s612
      %s614 = sshll.u32 [#allocation11], 4
      %s615 = int_to_ptr.vmem [resolvable:$true] %s614
      %620 = dma.vmem_to_hbm [thread:$0]  %s615, 256, %s11, [#allocation4], 128, 128, 8
    $region69: #{decoder_forward.1} parent=1 // pred_fallthru
      _
    // Predicated region
    $region70: #{decoder_forward.1} parent=1 // pred_check
      _
    $region71: #{decoder_forward.1} parent=1 // pred_check_branch
      %622 = sbr.rel (0) target = $region73
    $region72: #{decoder_forward.1} parent=1 // pred_region
      %623 = dma.done [#allocation4], 256
    $region73: #{decoder_forward.1} parent=1 // pred_fallthru
      _
    %624 = vsyncpa [#allocation3], 1
    %625 = vsyncpa [#allocation6], 1
    %626 = vsyncpa [#allocation9], 1
    %627 = vsyncpa [#allocation4], 1

</llo_original>
